<compile_context>
chip_gen: v7x
topology: tpu7x:2x2x1
jax: 0.10.0
libtpu: 0.0.40
codegen_flags: <defaults>
</compile_context>

<pallas_src>
import jax
import jax.numpy as jnp
from jax.experimental import pallas as pl
from jax.experimental.pallas import tpu as pltpu


# ----------------------------------------------------------------------------
# Pallas kernel: fused per-row affine  Y = X * scale + shift   (VPU, mem-bound)
# ----------------------------------------------------------------------------
def _frozen_bn_kernel(x_ref, sb_ref, o_ref):
    # x: (tm, tl)   sb: (tm, 2) = [scale, shift]   o: (tm, tl)
    sb = sb_ref[...]
    scale = sb[:, 0:1]          # (tm, 1) -> lane-broadcast against the tile
    shift = sb[:, 1:2]
    o_ref[...] = x_ref[...] * scale + shift


# ----------------------------------------------------------------------------
# Tile planning with honest VMEM accounting
# ----------------------------------------------------------------------------
def _vmem_capacity_bytes():
    try:
        cap = int(pltpu.get_tpu_info().vmem_capacity_bytes)
        if cap > 0:
            return cap
    except Exception:
        pass
    return 64 * 1024 * 1024            # conservative fallback (v7x per-TC VMEM)


def _round_down(v, mult):
    return (v // mult) * mult


def _round_up(v, mult):
    return ((v + mult - 1) // mult) * mult


def _tile_plan(m, l, itemsize):
    """Pick (tm, tl, vmem_limit_bytes).

    Real pipelined VMEM footprint:
        2 x (x tile) + 2 x (out tile) + 2 x lane-padded (tm,2)->(tm,128) sb tile
      = itemsize * tm * (4*tl + 2*128)
    """
    lane = 128
    cap = _vmem_capacity_bytes()
    budget = int(cap * 0.60)           # headroom for compiler internal scratch

    # Sublane packing factor per dtype width (f32:8, bf16/f16:16, i8/fp8:32).
    pack = {4: 8, 2: 16, 1: 32}.get(itemsize, 8)

    def footprint(tm, tl):
        return itemsize * tm * (4 * tl + 2 * lane)

    # --- lane (last-dim) tile: prefer lane-dense full-L blocks ---
    min_tm = m if m <= pack else pack
    if footprint(min_tm, l) <= budget:
        tl = l                                       # full extent (lane dense)
    else:
        tl_max = (budget // (itemsize * min_tm) - 2 * lane) // 4
        tl = max(lane, _round_down(tl_max, lane))    # 128-multiple chunks

    # --- row (second-minor) tile: as large as the budget allows ---
    if m <= pack:
        tm = m                                       # full extent is always legal
    else:
        tm_max = budget // (itemsize * (4 * tl + 2 * lane))
        tm = max(pack, _round_down(min(tm_max, m), pack))

    # v7x megacore: avoid a degenerate 1-step grid when there is real work.
    total_bytes = m * l * itemsize
    if (pl.cdiv(m, tm) * pl.cdiv(l, tl) < 2) and total_bytes > (4 << 20):
        if m > pack:
            tm = max(pack, _round_up(pl.cdiv(m, 2), pack))
        elif l > lane:
            tl = max(lane, _round_up(pl.cdiv(l, 2), lane))

    vmem_limit = int(min(cap, footprint(tm, tl) + (8 << 20)))
    return tm, tl, vmem_limit


# ----------------------------------------------------------------------------
# FrozenBatchNorm2d forward (NCHW interface, like PyTorch)
# ----------------------------------------------------------------------------
def frozen_batch_norm_2d(x_nchw, weight, bias, running_mean, running_var):
    n, c, h, w = x_nchw.shape
    dtype = x_nchw.dtype

    # Fold buffers into a per-channel affine once.  Do the O(C) fold in float32
    # (accurate) and cast the two tiny vectors to x.dtype afterwards; only for
    # fp16 inputs fold in fp16 to mirror the module's buffer-recast branch.
    fold_dtype = jnp.float16 if dtype == jnp.float16 else jnp.float32
    wgt = weight.astype(fold_dtype)
    b_ = bias.astype(fold_dtype)
    mu = running_mean.astype(fold_dtype)
    var = running_var.astype(fold_dtype)
    scale = wgt * jax.lax.rsqrt(var)       # NOTE: no eps, matching mmf's module
    shift = b_ - mu * scale

    m = n * c
    l = h * w
    x2 = x_nchw.reshape(m, l)              # contiguous -> free reshape, no copy
    # One packed (N*C, 2) [scale, shift] side input (single tiny per-step DMA).
    sb = jnp.stack([jnp.tile(scale, n), jnp.tile(shift, n)], axis=1).astype(dtype)

    itemsize = jnp.dtype(dtype).itemsize
    tm, tl, vmem_limit = _tile_plan(m, l, itemsize)

    grid = (pl.cdiv(m, tm), pl.cdiv(l, tl))

    y2 = pl.pallas_call(
        _frozen_bn_kernel,
        out_shape=jax.ShapeDtypeStruct((m, l), dtype),
        grid=grid,
        in_specs=[
            pl.BlockSpec((tm, tl), lambda i, j: (i, j)),   # x tile
            pl.BlockSpec((tm, 2), lambda i, j: (i, 0)),    # packed scale/shift
        ],
        out_specs=pl.BlockSpec((tm, tl), lambda i, j: (i, j)),
        compiler_params=pltpu.CompilerParams(
            dimension_semantics=("parallel", "parallel"),
            vmem_limit_bytes=vmem_limit,
        ),
    )(x2, sb)

    return y2.reshape(n, c, h, w)


if __name__ == "__main__":
    key = jax.random.PRNGKey(0)
    kx, kw, kb, km, kv = jax.random.split(key, 5)

    N, C, H, W = 2, 4, 16, 16
    x = jax.random.normal(kx, (N, C, H, W), jnp.float32)
    weight = jax.random.uniform(kw, (C,), jnp.float32, 0.5, 1.5)
    bias = jax.random.normal(kb, (C,), jnp.float32)
    running_mean = jax.random.normal(km, (C,), jnp.float32)
    running_var = jax.random.uniform(kv, (C,), jnp.float32, 0.5, 2.0)

    fwd = jax.jit(frozen_batch_norm_2d)
    y = jax.block_until_ready(fwd(x, weight, bias, running_mean, running_var))

    # Pure-JAX reference (exactly the PyTorch module's math, no eps).
    scale_ref = weight * jax.lax.rsqrt(running_var)
    shift_ref = bias - running_mean * scale_ref
    y_ref = x * scale_ref.reshape(1, C, 1, 1) + shift_ref.reshape(1, C, 1, 1)

    assert y.shape == (N, C, H, W), y.shape
    assert y.dtype == jnp.float32
    assert bool(jnp.all(jnp.isfinite(y)))
    assert bool(jnp.allclose(y, y_ref, rtol=1e-6, atol=1e-6))

    print("KERNEL_OK")
</pallas_src>

<mosaic_0001>
module attributes {stable_mosaic.version = 11 : i64} {
  func.func @_frozen_bn_kernel(%arg0: i32, %arg1: i32, %arg2: memref<8x256xf32, #tpu.memory_space<vmem>>, %arg3: memref<8x2xf32, #tpu.memory_space<vmem>>, %arg4: memref<8x256xf32, #tpu.memory_space<vmem>>) attributes {dimension_semantics = [#tpu.dimension_semantics<parallel>, #tpu.dimension_semantics<parallel>], iteration_bounds = array<i64: 1, 1>, scalar_prefetch = 0 : i64, scratch_operands = 0 : i64, tpu.core_type = #tpu.core_type<tc>, window_params = [{transform_indices = @transform_0, window_bounds = array<i64: 8, 256>}, {transform_indices = @transform_1, window_bounds = array<i64: 8, 2>}, {transform_indices = @transform_2, window_bounds = array<i64: 8, 256>}]} {
    %c0 = arith.constant 0 : index
    %c0_0 = arith.constant 0 : index
    %0 = vector.load %arg3[%c0, %c0_0] : memref<8x2xf32, #tpu.memory_space<vmem>>, vector<8x2xf32>
    %1 = vector.extract_strided_slice %0 {offsets = [0, 0], sizes = [8, 1], strides = [1, 1]} : vector<8x2xf32> to vector<8x1xf32>
    %2 = vector.extract_strided_slice %0 {offsets = [0, 1], sizes = [8, 1], strides = [1, 1]} : vector<8x2xf32> to vector<8x1xf32>
    %c0_1 = arith.constant 0 : index
    %c0_2 = arith.constant 0 : index
    %3 = vector.load %arg2[%c0_1, %c0_2] : memref<8x256xf32, #tpu.memory_space<vmem>>, vector<8x256xf32>
    %4 = vector.broadcast %1 : vector<8x1xf32> to vector<8x256xf32>
    %5 = arith.mulf %3, %4 : vector<8x256xf32>
    %6 = vector.broadcast %2 : vector<8x1xf32> to vector<8x256xf32>
    %7 = arith.addf %5, %6 : vector<8x256xf32>
    %c0_3 = arith.constant 0 : index
    %c0_4 = arith.constant 0 : index
    %8 = vector.load %arg4[%c0_3, %c0_4] : memref<8x256xf32, #tpu.memory_space<vmem>>, vector<8x256xf32>
    tpu.vector_store %arg4[%c0_3, %c0_4], %7 {strides = array<i32>} : memref<8x256xf32, #tpu.memory_space<vmem>>, vector<8x256xf32>,
    return
  }
  func.func @transform_0(%arg0: i32, %arg1: i32) -> (i32, i32) {
    %c0_i32 = arith.constant 0 : i32
    return %arg0, %arg1 : i32, i32
  }
  func.func @transform_1(%arg0: i32, %arg1: i32) -> (i32, i32) {
    %c0_i32 = arith.constant 0 : i32
    %c0_i32_0 = arith.constant 0 : i32
    return %arg0, %c0_i32 : i32, i32
  }
  func.func @transform_2(%arg0: i32, %arg1: i32) -> (i32, i32) {
    %c0_i32 = arith.constant 0 : i32
    return %arg0, %arg1 : i32, i32
  }
}

</mosaic_0001>

<llo_original>
// kernel: tile.17
$region0: #{tile.17}
  #allocation0 [shape = 's32[1]{0}', space=sflag, size = 0x4, scoped, tag = 'scoped memory for tile.17']
  %s0 = inlined_call_operand.vmem [shape: f32[4], index: 0, kind: input, shape index: {}]
  %s1 = inlined_call_operand.vmem [shape: f32[2,4], index: 1, kind: output, shape index: {}]
  // Predicated region
  $region2: #{tile.17} parent=0 // pred_check
    _
  $region3: #{tile.17} parent=0 // pred_check_branch
    %3 = sbr.rel (0) target = $region5
  $region4: #{tile.17} parent=0 // pred_region
    _
  $region5: #{tile.17} parent=0 // pred_fallthru
    _
  %v4 = vld [vmem:[%s0] ss:$0 sm:$0xff]
  %5 = vst [vmem:[%s1] sm:$0x3] %v4

// kernel: tile.19
$region0: #{tile.19}
  %s0 = inlined_call_operand.vmem [shape: f32[2,4], index: 0, kind: input, shape index: {}]
  %s1 = inlined_call_operand.vmem [shape: f32[8,1], index: 1, kind: output, shape index: {}]
  $region1: #{tile.19} parent=0
    #allocation0 [shape = 'u8[4096]{0}', space=vmem, size = 0x1000, scoped, tag = 'scoped mem for output reshape']
    #allocation1 [shape = 'u8[4096]{0}', space=vmem, size = 0x1000, scoped, tag = 'scoped mem for input reshape']
    %s3 = sshllo.u32 0, 2
    %v4 = vld [vmem:[%s0] sm:%s3]
    %5 = vst [vmem:[#allocation1] sm:%s3] %v4
    %v6 = vld [vmem:[#allocation1] sm:$0x1]
    %vm7 = vcmask 31744
    %8 = vst.msk [vmem:[#allocation0] sm:$0x1] %vm7, %v6
    %s9 = scalar_lea.vmem [#allocation1], 1
    %v10 = vld [vmem:[%s9] sm:$0x1]
    %11 = vrot.lane.b32.xlu0 %v10, 4
    %v12 = vpop.permute.xlu0 %11
    %vm13 = vcmask 64544
    %14 = vst.msk [vmem:[#allocation0] sm:$0x1] %vm13, %v12
    %s16 = sshllo.u32 0, 1
    %v18 = vld [vmem:[#allocation0] sm:%s16]
    %s19 = sshllo.u32 0, 1
    %20 = vst [vmem:[%s1] sm:%s19] %v18

// kernel: frozen_batch_norm_2d.1
$region0: #{frozen_batch_norm_2d.1}
  #allocation0 [shape = 'u32[]', space=smem, size = 0x4, offset = 0x4, fixed_abs, tag = 'smem constant byte address 0x4 - core index']
  #allocation1 [shape = 'u32[144,128]{1,0:T(1,128)}', space=vmem, size = 0x12000, scoped, tag = 'internal scratch']
  %s0 = inlined_call_operand.vmem [shape: f32[8,256], index: 0, kind: input, shape index: {}]
  %s1 = inlined_call_operand.vmem [shape: f32[8,2], index: 1, kind: input, shape index: {}]
  %s2 = inlined_call_operand.vmem [shape: f32[8,256], index: 2, kind: output, shape index: {}]
  %s3 = sld [smem:[#allocation0]]
  $region18: #{frozen_batch_norm_2d.1} parent=0
    _
  %s5 = ssub.s32 1, %s3
  %s6 = scalar_select 0, %s5, %s3
  // Predicated region
  $region2: #{frozen_batch_norm_2d.1} parent=0 // pred_check
    _
  $region3: #{frozen_batch_norm_2d.1} parent=0 // pred_check_branch
    %8 = sbr.rel (0) target = $region5
  $region4: #{frozen_batch_norm_2d.1} parent=0 // pred_region
    _
  $region5: #{frozen_batch_norm_2d.1} parent=0 // pred_fallthru
    _
  // Predicated region
  $region6: #{frozen_batch_norm_2d.1} parent=0 // pred_check
    _
  $region7: #{frozen_batch_norm_2d.1} parent=0 // pred_check_branch
    %10 = sbr.rel (0) target = $region9
  $region8: #{frozen_batch_norm_2d.1} parent=0 // pred_region
    _
  $region9: #{frozen_batch_norm_2d.1} parent=0 // pred_fallthru
    _
  %v11 = vld [vmem:[%s1] sm:$0xff]
  %v12 = vld [vmem:[%s0] sm:$0xff]
  %v13 = vld [vmem:[%s0 + $0x8] sm:$0xff]
  %15 = vset.pattern.permute.xlu0 0
  %16 = vperm.xlu0 %15, %v11
  %v17 = vpop.permute.xlu0 %16
  %v19 = vmul.f32 %v12, %v17
  %v20 = vmul.f32 %v13, %v17
  %21 = vset.pattern.permute.xlu0 1
  %22 = vperm.xlu0 %21, %v11
  %v23 = vpop.permute.xlu0 %22
  %v25 = vadd.f32 %v19, %v23
  %v26 = vadd.f32 %v20, %v23
  %27 = vst [vmem:[%s2] sm:$0xff] %v25
  %28 = vst [vmem:[%s2 + $0x8] sm:$0xff] %v26
  // Predicated region
  $region10: #{frozen_batch_norm_2d.1} parent=0 // pred_check
    _
  $region11: #{frozen_batch_norm_2d.1} parent=0 // pred_check_branch
    %30 = sbr.rel (0) target = $region13
  $region12: #{frozen_batch_norm_2d.1} parent=0 // pred_region
    _
  $region13: #{frozen_batch_norm_2d.1} parent=0 // pred_fallthru
    _
  // Predicated region
  $region14: #{frozen_batch_norm_2d.1} parent=0 // pred_check
    _
  $region15: #{frozen_batch_norm_2d.1} parent=0 // pred_check_branch
    %32 = sbr.rel (0) target = $region17
  $region16: #{frozen_batch_norm_2d.1} parent=0 // pred_region
    _
  $region17: #{frozen_batch_norm_2d.1} parent=0 // pred_fallthru
    _

</llo_original>
